<compile_context>
chip_gen: v7x
topology: tpu7x:2x2x1
jax: 0.10.0
libtpu: 0.0.40
codegen_flags: <defaults>
</compile_context>

<pallas_src>
import functools
import math

import jax
import jax.numpy as jnp
from jax.experimental import pallas as pl
from jax.experimental.pallas import tpu as pltpu


def _round_up(x, m):
    return ((x + m - 1) // m) * m


# ---------------------------------------------------------------------------
# Fused GCNII kernel: grid axis = layer index l (sequential / "arbitrary")
# ---------------------------------------------------------------------------
def _gcnii_fused_kernel(theta_ref,                       # SMEM prefetch [L] f32
                        adj_ref, x_ref, wdim_ref, bdim_ref,
                        ws_ref, wout_ref, bout_ref,      # inputs (VMEM)
                        out_ref,                         # output (VMEM, f32)
                        h_scr, h0_scr,                   # VMEM scratch (bf16 / f32)
                        *, alpha, num_layers):
    l = pl.program_id(0)

    # ---- step 0: fc_dim + ReLU -> h0 (f32) and h (bf16) resident in VMEM ----
    @pl.when(l == 0)
    def _():
        h0 = jnp.dot(x_ref[...], wdim_ref[...],
                     preferred_element_type=jnp.float32)
        h0 = jnp.maximum(h0 + bdim_ref[...], 0.0)
        h0_scr[...] = h0                                  # keep f32 (VPU-only use)
        h_scr[...] = h0.astype(h_scr.dtype)               # bf16 MXU operand

    # ---- GCNII GraphConvolution layer l (variant=False, residual=False) ----
    theta = theta_ref[l]                                  # SMEM scalar read
    hi = jnp.dot(adj_ref[...], h_scr[...],
                 preferred_element_type=jnp.float32)      # adj @ h   (bf16 MXU)
    support = (1.0 - alpha) * hi + alpha * h0_scr[...]    # f32 VPU math
    mm = jnp.dot(support.astype(ws_ref.dtype), ws_ref[0],
                 preferred_element_type=jnp.float32)      # support @ W_l.T
    h_new = jnp.maximum(theta * mm + (1.0 - theta) * support, 0.0)
    h_scr[...] = h_new.astype(h_scr.dtype)

    # ---- last step: fc_out epilogue (no ReLU) ----
    @pl.when(l == num_layers - 1)
    def _():
        y = jnp.dot(h_new.astype(wout_ref.dtype), wout_ref[...],
                    preferred_element_type=jnp.float32)
        out_ref[...] = (y + bout_ref[...]).astype(out_ref.dtype)


# ---------------------------------------------------------------------------
# One-time parameter preparation: transpose, pad to 128-multiples, cast to bf16
# ---------------------------------------------------------------------------
def prepare_gcnii(adj_norm, params, *, compute_dtype=jnp.bfloat16):
    n = adj_norm.shape[0]
    hidden, in_ch = params["w_dim"].shape          # PyTorch [out, in] layout
    out_ch = params["w_out"].shape[0]
    n_p = _round_up(n, 128)
    in_p = _round_up(in_ch, 128)
    h_p = _round_up(hidden, 128)
    out_p = _round_up(out_ch, 128)

    def pad2(a, rows, cols):
        return jnp.pad(a, ((0, rows - a.shape[0]), (0, cols - a.shape[1])))

    prepped = {
        "adj": pad2(adj_norm, n_p, n_p).astype(compute_dtype),
        "w_dim_t": pad2(params["w_dim"].T, in_p, h_p).astype(compute_dtype),
        "b_dim": jnp.pad(params["b_dim"], (0, h_p - hidden))
                   .reshape(1, h_p).astype(jnp.float32),
        "ws_t": jnp.stack([pad2(w.T, h_p, h_p) for w in params["layer_ws"]])
                   .astype(compute_dtype),
        "w_out_t": pad2(params["w_out"].T, h_p, out_p).astype(compute_dtype),
        "b_out": jnp.pad(params["b_out"], (0, out_p - out_ch))
                   .reshape(1, out_p).astype(jnp.float32),
    }
    dims = dict(n=n, n_p=n_p, in_ch=in_ch, in_p=in_p, hidden=hidden, h_p=h_p,
                out_ch=out_ch, out_p=out_p,
                num_layers=len(params["layer_ws"]),
                compute_dtype=compute_dtype)
    return prepped, dims


# ---------------------------------------------------------------------------
# Forward wrapper: one pallas_call for the whole GCNII stack
# ---------------------------------------------------------------------------
def gcnii_forward(x, prepped, dims, *, lamda, alpha):
    L = dims["num_layers"]
    assert L >= 1, "need at least one GraphConvolution layer"
    n, n_p = dims["n"], dims["n_p"]
    in_ch, in_p = dims["in_ch"], dims["in_p"]
    h_p = dims["h_p"]
    out_ch, out_p = dims["out_ch"], dims["out_p"]
    cdt = dims["compute_dtype"]

    x_p = jnp.pad(x, ((0, n_p - n), (0, in_p - in_ch))).astype(cdt)
    thetas = jnp.array([math.log(lamda / (i + 1) + 1.0) for i in range(L)],
                       dtype=jnp.float32)

    # index_maps get (grid_idx, *prefetch_refs) positionally
    const2 = lambda l, thetas: (0, 0)
    ws_map = lambda l, thetas: (l, 0, 0)

    itemsize = jnp.dtype(cdt).itemsize
    flops = (2 * n_p * in_p * h_p
             + L * (2 * n_p * n_p * h_p + 2 * n_p * h_p * h_p)
             + 2 * n_p * h_p * out_p)
    bytes_accessed = (n_p * n_p * itemsize + n_p * in_p * itemsize
                      + in_p * h_p * itemsize + L * h_p * h_p * itemsize
                      + h_p * out_p * itemsize
                      + (h_p + out_p) * 4 + n_p * out_p * 4)

    grid_spec = pltpu.PrefetchScalarGridSpec(
        num_scalar_prefetch=1,
        grid=(L,),
        in_specs=[
            pl.BlockSpec((n_p, n_p), const2),        # adj   (resident)
            pl.BlockSpec((n_p, in_p), const2),       # x     (resident)
            pl.BlockSpec((in_p, h_p), const2),       # W_dim.T
            pl.BlockSpec((1, h_p), const2),          # b_dim
            pl.BlockSpec((1, h_p, h_p), ws_map),     # W_l.T streamed per layer
            pl.BlockSpec((h_p, out_p), const2),      # W_out.T
            pl.BlockSpec((1, out_p), const2),        # b_out
        ],
        out_specs=pl.BlockSpec((n_p, out_p), const2),
        scratch_shapes=[pltpu.VMEM((n_p, h_p), cdt),          # h  (bf16 MXU operand)
                        pltpu.VMEM((n_p, h_p), jnp.float32)],  # h0 (f32, VPU only)
    )

    out_padded = pl.pallas_call(
        functools.partial(_gcnii_fused_kernel,
                          alpha=float(alpha), num_layers=L),
        out_shape=jax.ShapeDtypeStruct((n_p, out_p), jnp.float32),
        grid_spec=grid_spec,
        compiler_params=pltpu.CompilerParams(
            dimension_semantics=("arbitrary",),
            vmem_limit_bytes=32 * 1024 * 1024),
        cost_estimate=pl.CostEstimate(flops=flops, transcendentals=0,
                                      bytes_accessed=bytes_accessed),
    )(thetas, prepped["adj"], x_p, prepped["w_dim_t"], prepped["b_dim"],
      prepped["ws_t"], prepped["w_out_t"], prepped["b_out"])

    return out_padded[:n, :out_ch]


# ---------------------------------------------------------------------------
# Helpers / reference
# ---------------------------------------------------------------------------
def normalize_adj_in(adj):
    # normt_spm(..., method='in'): A' = diag(1/rowsum(A.T)) @ A.T
    at = adj.T
    rowsum = at.sum(axis=1)
    r_inv = jnp.where(rowsum > 0, 1.0 / rowsum, 0.0)
    return r_inv[:, None] * at


def gcnii_reference(x, adj_norm, params, *, lamda, alpha):
    h = jnp.maximum(x @ params["w_dim"].T + params["b_dim"], 0.0)
    h0 = h
    for i, w in enumerate(params["layer_ws"]):
        theta = math.log(lamda / (i + 1) + 1.0)
        hi = adj_norm @ h
        support = (1.0 - alpha) * hi + alpha * h0
        h = jnp.maximum(theta * (support @ w.T) + (1.0 - theta) * support, 0.0)
    return h @ params["w_out"].T + params["b_out"]


if __name__ == "__main__":
    # Small, deterministic problem sizes.
    N_NODES = 16
    IN_CH = 8
    HIDDEN = 32
    OUT_CH = 4
    N_LAYERS = 2
    LAMDA = 1.0
    ALPHA = 0.1

    key = jax.random.PRNGKey(0)
    keys = jax.random.split(key, 8)

    # Node features.
    x = jax.random.normal(keys[0], (N_NODES, IN_CH), dtype=jnp.float32)

    # Deterministic synthetic adjacency (non-negative, with self loops).
    adj_raw = (jax.random.uniform(keys[1], (N_NODES, N_NODES)) > 0.7)
    adj_raw = adj_raw.astype(jnp.float32) + jnp.eye(N_NODES, dtype=jnp.float32)
    adj_norm = normalize_adj_in(adj_raw)

    # Parameters (deterministic init, PyTorch [out, in] weight layout).
    def uinit(k, shape, fan_in):
        bound = 1.0 / math.sqrt(fan_in)
        return jax.random.uniform(k, shape, jnp.float32, -bound, bound)

    layer_keys = jax.random.split(keys[4], N_LAYERS)
    params = {
        "w_dim": uinit(keys[2], (HIDDEN, IN_CH), IN_CH),
        "b_dim": uinit(keys[3], (HIDDEN,), IN_CH),
        "layer_ws": [uinit(layer_keys[i], (HIDDEN, HIDDEN), HIDDEN)
                     for i in range(N_LAYERS)],
        "w_out": uinit(keys[5], (OUT_CH, HIDDEN), HIDDEN),
        "b_out": uinit(keys[6], (OUT_CH,), HIDDEN),
    }

    # One-time prep: transpose / pad / cast weights + adj (not per forward).
    prepped, dims = prepare_gcnii(adj_norm, params, compute_dtype=jnp.bfloat16)

    # Jit the forward so pad -> pallas_call -> slice fuse into one executable.
    fwd = jax.jit(lambda xx: gcnii_forward(xx, prepped, dims,
                                           lamda=LAMDA, alpha=ALPHA))

    out = fwd(x)
    out = jax.block_until_ready(out)

    ref = gcnii_reference(x, adj_norm, params, lamda=LAMDA, alpha=ALPHA)
    assert out.shape == (N_NODES, OUT_CH)
    # bf16 MXU inputs (f32 accumulation) => relaxed tolerance vs pure-f32 reference.
    assert jnp.allclose(out, ref, atol=5e-2, rtol=5e-2), "mismatch vs reference"

    print("KERNEL_OK")
</pallas_src>

<mosaic_0001>
module attributes {stable_mosaic.version = 11 : i64} {
  func.func @_gcnii_fused_kernel(%arg0: i32, %arg1: memref<2xf32, #tpu.memory_space<smem>>, %arg2: memref<128x128xbf16, #tpu.memory_space<vmem>>, %arg3: memref<128x128xbf16, #tpu.memory_space<vmem>>, %arg4: memref<128x128xbf16, #tpu.memory_space<vmem>>, %arg5: memref<1x128xf32, #tpu.memory_space<vmem>>, %arg6: memref<1x128x128xbf16, #tpu.memory_space<vmem>>, %arg7: memref<128x128xbf16, #tpu.memory_space<vmem>>, %arg8: memref<1x128xf32, #tpu.memory_space<vmem>>, %arg9: memref<128x128xf32, #tpu.memory_space<vmem>>, %arg10: memref<128x128xbf16, #tpu.memory_space<vmem>>, %arg11: memref<128x128xf32, #tpu.memory_space<vmem>>) attributes {dimension_semantics = [#tpu.dimension_semantics<arbitrary>], iteration_bounds = array<i64: 2>, scalar_prefetch = 1 : i64, scratch_operands = 2 : i64, tpu.core_type = #tpu.core_type<tc>, window_params = [{pipeline_mode = #tpu.pipeline_mode<synchronous>, transform_indices = @transform_0, window_bounds = array<i64: 128, 128>}, {pipeline_mode = #tpu.pipeline_mode<synchronous>, transform_indices = @transform_1, window_bounds = array<i64: 128, 128>}, {pipeline_mode = #tpu.pipeline_mode<synchronous>, transform_indices = @transform_2, window_bounds = array<i64: 128, 128>}, {pipeline_mode = #tpu.pipeline_mode<synchronous>, transform_indices = @transform_3, window_bounds = array<i64: 1, 128>}, {transform_indices = @transform_4, window_bounds = array<i64: 1, 128, 128>}, {pipeline_mode = #tpu.pipeline_mode<synchronous>, transform_indices = @transform_5, window_bounds = array<i64: 128, 128>}, {pipeline_mode = #tpu.pipeline_mode<synchronous>, transform_indices = @transform_6, window_bounds = array<i64: 1, 128>}, {pipeline_mode = #tpu.pipeline_mode<synchronous>, transform_indices = @transform_7, window_bounds = array<i64: 128, 128>}]} {
    %c0_i32 = arith.constant 0 : i32
    %0 = arith.cmpi eq, %arg0, %c0_i32 : i32
    %1 = arith.extui %0 : i1 to i32
    %c0_i32_0 = arith.constant 0 : i32
    %2 = arith.cmpi ne, %1, %c0_i32_0 : i32
    scf.if %2 {
      %c0_17 = arith.constant 0 : index
      %c0_18 = arith.constant 0 : index
      %31 = vector.load %arg3[%c0_17, %c0_18] : memref<128x128xbf16, #tpu.memory_space<vmem>>, vector<128x128xbf16>
      %c0_19 = arith.constant 0 : index
      %c0_20 = arith.constant 0 : index
      %32 = vector.load %arg4[%c0_19, %c0_20] : memref<128x128xbf16, #tpu.memory_space<vmem>>, vector<128x128xbf16>
      %cst_21 = arith.constant dense<0.000000e+00> : vector<128x128xf32>
      %33 = tpu.matmul %31, %32, %cst_21 {dimension_numbers = #tpu.dot_dimension_numbers<[1], [0], [0], [1], [0, 0, 1, 1], [], []>} : vector<128x128xbf16>, vector<128x128xbf16>, vector<128x128xf32> -> vector<128x128xf32>
      %c0_22 = arith.constant 0 : index
      %c0_23 = arith.constant 0 : index
      %34 = vector.load %arg5[%c0_22, %c0_23] : memref<1x128xf32, #tpu.memory_space<vmem>>, vector<1x128xf32>
      %35 = vector.broadcast %34 : vector<1x128xf32> to vector<128x128xf32>
      %36 = arith.addf %33, %35 : vector<128x128xf32>
      %cst_24 = arith.constant 0.000000e+00 : f32
      %37 = vector.broadcast %cst_24 : f32 to vector<128x128xf32>
      %38 = arith.maximumf %36, %37 : vector<128x128xf32>
      %c0_25 = arith.constant 0 : index
      %c0_26 = arith.constant 0 : index
      %39 = vector.load %arg11[%c0_25, %c0_26] : memref<128x128xf32, #tpu.memory_space<vmem>>, vector<128x128xf32>
      tpu.vector_store %arg11[%c0_25, %c0_26], %38 {strides = array<i32>} : memref<128x128xf32, #tpu.memory_space<vmem>>, vector<128x128xf32>,
      %40 = arith.truncf %38 : vector<128x128xf32> to vector<128x128xbf16>
      %c0_27 = arith.constant 0 : index
      %c0_28 = arith.constant 0 : index
      %41 = vector.load %arg10[%c0_27, %c0_28] : memref<128x128xbf16, #tpu.memory_space<vmem>>, vector<128x128xbf16>
      tpu.vector_store %arg10[%c0_27, %c0_28], %40 {strides = array<i32>} : memref<128x128xbf16, #tpu.memory_space<vmem>>, vector<128x128xbf16>,
    } else {
    }
    %3 = arith.index_cast %arg0 : i32 to index
    %4 = memref.load %arg1[%3] : memref<2xf32, #tpu.memory_space<smem>>
    %c0 = arith.constant 0 : index
    %c0_1 = arith.constant 0 : index
    %5 = vector.load %arg2[%c0, %c0_1] : memref<128x128xbf16, #tpu.memory_space<vmem>>, vector<128x128xbf16>
    %c0_2 = arith.constant 0 : index
    %c0_3 = arith.constant 0 : index
    %6 = vector.load %arg10[%c0_2, %c0_3] : memref<128x128xbf16, #tpu.memory_space<vmem>>, vector<128x128xbf16>
    %cst = arith.constant dense<0.000000e+00> : vector<128x128xf32>
    %7 = tpu.matmul %5, %6, %cst {dimension_numbers = #tpu.dot_dimension_numbers<[1], [0], [0], [1], [0, 0, 1, 1], [], []>} : vector<128x128xbf16>, vector<128x128xbf16>, vector<128x128xf32> -> vector<128x128xf32>
    %cst_4 = arith.constant 0.899999976 : f32
    %8 = vector.broadcast %cst_4 : f32 to vector<128x128xf32>
    %9 = arith.mulf %8, %7 : vector<128x128xf32>
    %c0_5 = arith.constant 0 : index
    %c0_6 = arith.constant 0 : index
    %10 = vector.load %arg11[%c0_5, %c0_6] : memref<128x128xf32, #tpu.memory_space<vmem>>, vector<128x128xf32>
    %cst_7 = arith.constant 1.000000e-01 : f32
    %11 = vector.broadcast %cst_7 : f32 to vector<128x128xf32>
    %12 = arith.mulf %11, %10 : vector<128x128xf32>
    %13 = arith.addf %9, %12 : vector<128x128xf32>
    %14 = arith.truncf %13 : vector<128x128xf32> to vector<128x128xbf16>
    %c0_8 = arith.constant 0 : index
    %c0_9 = arith.constant 0 : index
    %c0_10 = arith.constant 0 : index
    %15 = vector.load %arg6[%c0_8, %c0_9, %c0_10] : memref<1x128x128xbf16, #tpu.memory_space<vmem>>, vector<1x128x128xbf16>
    %16 = vector.shape_cast %15 : vector<1x128x128xbf16> to vector<128x128xbf16>
    %cst_11 = arith.constant dense<0.000000e+00> : vector<128x128xf32>
    %17 = tpu.matmul %14, %16, %cst_11 {dimension_numbers = #tpu.dot_dimension_numbers<[1], [0], [0], [1], [0, 0, 1, 1], [], []>} : vector<128x128xbf16>, vector<128x128xbf16>, vector<128x128xf32> -> vector<128x128xf32>
    %18 = vector.broadcast %4 : f32 to vector<128x128xf32>
    %19 = arith.mulf %18, %17 : vector<128x128xf32>
    %cst_12 = arith.constant 1.000000e+00 : f32
    %20 = arith.subf %cst_12, %4 : f32
    %21 = vector.broadcast %20 : f32 to vector<128x128xf32>
    %22 = arith.mulf %21, %13 : vector<128x128xf32>
    %23 = arith.addf %19, %22 : vector<128x128xf32>
    %cst_13 = arith.constant 0.000000e+00 : f32
    %24 = vector.broadcast %cst_13 : f32 to vector<128x128xf32>
    %25 = arith.maximumf %23, %24 : vector<128x128xf32>
    %26 = arith.truncf %25 : vector<128x128xf32> to vector<128x128xbf16>
    %c0_14 = arith.constant 0 : index
    %c0_15 = arith.constant 0 : index
    %27 = vector.load %arg10[%c0_14, %c0_15] : memref<128x128xbf16, #tpu.memory_space<vmem>>, vector<128x128xbf16>
    tpu.vector_store %arg10[%c0_14, %c0_15], %26 {strides = array<i32>} : memref<128x128xbf16, #tpu.memory_space<vmem>>, vector<128x128xbf16>,
    %c1_i32 = arith.constant 1 : i32
    %28 = arith.cmpi eq, %arg0, %c1_i32 : i32
    %29 = arith.extui %28 : i1 to i32
    %c0_i32_16 = arith.constant 0 : i32
    %30 = arith.cmpi ne, %29, %c0_i32_16 : i32
    scf.if %30 {
      %31 = arith.truncf %25 : vector<128x128xf32> to vector<128x128xbf16>
      %c0_17 = arith.constant 0 : index
      %c0_18 = arith.constant 0 : index
      %32 = vector.load %arg7[%c0_17, %c0_18] : memref<128x128xbf16, #tpu.memory_space<vmem>>, vector<128x128xbf16>
      %cst_19 = arith.constant dense<0.000000e+00> : vector<128x128xf32>
      %33 = tpu.matmul %31, %32, %cst_19 {dimension_numbers = #tpu.dot_dimension_numbers<[1], [0], [0], [1], [0, 0, 1, 1], [], []>} : vector<128x128xbf16>, vector<128x128xbf16>, vector<128x128xf32> -> vector<128x128xf32>
      %c0_20 = arith.constant 0 : index
      %c0_21 = arith.constant 0 : index
      %34 = vector.load %arg8[%c0_20, %c0_21] : memref<1x128xf32, #tpu.memory_space<vmem>>, vector<1x128xf32>
      %35 = vector.broadcast %34 : vector<1x128xf32> to vector<128x128xf32>
      %36 = arith.addf %33, %35 : vector<128x128xf32>
      %c0_22 = arith.constant 0 : index
      %c0_23 = arith.constant 0 : index
      %37 = vector.load %arg9[%c0_22, %c0_23] : memref<128x128xf32, #tpu.memory_space<vmem>>, vector<128x128xf32>
      tpu.vector_store %arg9[%c0_22, %c0_23], %36 {strides = array<i32>} : memref<128x128xf32, #tpu.memory_space<vmem>>, vector<128x128xf32>,
    } else {
    }
    return
  }
  func.func @transform_0(%arg0: i32, %arg1: memref<2xf32, #tpu.memory_space<smem>>) -> (i32, i32) {
    %c0_i32 = arith.constant 0 : i32
    %c0_i32_0 = arith.constant 0 : i32
    %c0_i32_1 = arith.constant 0 : i32
    return %c0_i32, %c0_i32_0 : i32, i32
  }
  func.func @transform_1(%arg0: i32, %arg1: memref<2xf32, #tpu.memory_space<smem>>) -> (i32, i32) {
    %c0_i32 = arith.constant 0 : i32
    %c0_i32_0 = arith.constant 0 : i32
    %c0_i32_1 = arith.constant 0 : i32
    return %c0_i32, %c0_i32_0 : i32, i32
  }
  func.func @transform_2(%arg0: i32, %arg1: memref<2xf32, #tpu.memory_space<smem>>) -> (i32, i32) {
    %c0_i32 = arith.constant 0 : i32
    %c0_i32_0 = arith.constant 0 : i32
    %c0_i32_1 = arith.constant 0 : i32
    return %c0_i32, %c0_i32_0 : i32, i32
  }
  func.func @transform_3(%arg0: i32, %arg1: memref<2xf32, #tpu.memory_space<smem>>) -> (i32, i32) {
    %c0_i32 = arith.constant 0 : i32
    %c0_i32_0 = arith.constant 0 : i32
    %c0_i32_1 = arith.constant 0 : i32
    return %c0_i32, %c0_i32_0 : i32, i32
  }
  func.func @transform_4(%arg0: i32, %arg1: memref<2xf32, #tpu.memory_space<smem>>) -> (i32, i32, i32) {
    %c0_i32 = arith.constant 0 : i32
    %c0_i32_0 = arith.constant 0 : i32
    %c0_i32_1 = arith.constant 0 : i32
    return %arg0, %c0_i32, %c0_i32_0 : i32, i32, i32
  }
  func.func @transform_5(%arg0: i32, %arg1: memref<2xf32, #tpu.memory_space<smem>>) -> (i32, i32) {
    %c0_i32 = arith.constant 0 : i32
    %c0_i32_0 = arith.constant 0 : i32
    %c0_i32_1 = arith.constant 0 : i32
    return %c0_i32, %c0_i32_0 : i32, i32
  }
  func.func @transform_6(%arg0: i32, %arg1: memref<2xf32, #tpu.memory_space<smem>>) -> (i32, i32) {
    %c0_i32 = arith.constant 0 : i32
    %c0_i32_0 = arith.constant 0 : i32
    %c0_i32_1 = arith.constant 0 : i32
    return %c0_i32, %c0_i32_0 : i32, i32
  }
  func.func @transform_7(%arg0: i32, %arg1: memref<2xf32, #tpu.memory_space<smem>>) -> (i32, i32) {
    %c0_i32 = arith.constant 0 : i32
    %c0_i32_0 = arith.constant 0 : i32
    %c0_i32_1 = arith.constant 0 : i32
    return %c0_i32, %c0_i32_0 : i32, i32
  }
}

</mosaic_0001>

<llo_original>
// kernel: _lambda_.1
$region0: #{_lambda_.1}
  #allocation0 [shape = 'u32[]', space=smem, size = 0x4, offset = 0x4, fixed_abs, tag = 'smem constant byte address 0x4 - core index']
  #allocation1 [shape = 'u32[144,128]{1,0:T(1,128)}', space=vmem, size = 0x12000, scoped, tag = 'internal scratch']
  #allocation2 [shape = 'bf16[128,128]{1,0:T(16,128)(2,1)}', space=vmem, size = 0x8000, scoped, tag = 'scratch operand']
  #allocation3 [shape = 'f32[128,128]{1,0:T(8,128)}', space=vmem, size = 0x10000, scoped, tag = 'scratch operand']
  #allocation4 [shape = 's32[1]{0}', space=sflag, size = 0x4, scoped, tag = 'scoped memory for _lambda_.1']
  #allocation5 [shape = 'u8[512]{0}', space=smem, size = 0x200, scoped, tag = 'prefetched SMEM operand 0']
  %s0 = inlined_call_operand.vmem [shape: f32[2], index: 0, kind: input, shape index: {}]
  %s1 = inlined_call_operand.hbm [shape: bf16[128,128], index: 1, kind: input, shape index: {}]
  %s2 = inlined_call_operand.vmem [shape: bf16[128,128], index: 2, kind: input, shape index: {}]
  %s3 = inlined_call_operand.hbm [shape: bf16[128,128], index: 3, kind: input, shape index: {}]
  %s4 = inlined_call_operand.vmem [shape: f32[1,128], index: 4, kind: input, shape index: {}]
  %s5 = inlined_call_operand.vmem [shape: bf16[2,128,128], index: 5, kind: input, shape index: {}]
  %s6 = inlined_call_operand.hbm [shape: bf16[128,128], index: 6, kind: input, shape index: {}]
  %s7 = inlined_call_operand.vmem [shape: f32[1,128], index: 7, kind: input, shape index: {}]
  %s8 = inlined_call_operand.vmem [shape: f32[128,128], index: 8, kind: output, shape index: {}]
  %s9 = sld [smem:[#allocation0]]
  $region81: #{_lambda_.1} parent=0
    _
  %s11 = ssub.s32 1, %s9
  %s12 = scalar_select 0, %s11, %s9
  %s13 = sshll.u32 %s0, 4
  %s14 = int_to_ptr.vmem [resolvable:$true] %s13
  %16 = dma.vmem_to_smem %s14, 16, [#allocation5], [#allocation4]
  %17 = dma.done [#allocation4], 16
  %18 = sfence
  $region1: #{_lambda_.1} parent=0
    #allocation6 [shape = 'u8[32768]{0}', space=vmem, size = 0x8000, scoped, tag = 'input window, operand 1, single buffered']
    #allocation7 [shape = 's32[2]{0}', space=sflag, size = 0x8, scoped, tag = 'scoped memory for _lambda_.1']
    #allocation8 [shape = 'u8[32768]{0}', space=vmem, size = 0x8000, scoped, tag = 'input window, operand 3, single buffered']
    #allocation9 [shape = 's32[1]{0}', space=sflag, size = 0x4, scoped, tag = 'scoped memory for _lambda_.1']
    #allocation10 [shape = 'u8[32768]{0}', space=vmem, size = 0x8000, scoped, tag = 'input window, operand 6, single buffered']
    %19 = vsyncpa [#allocation7], 0
    %20 = vsyncpa [#allocation9], 0
    loop: start=0, step=1, limit=4
    $region2: #{_lambda_.1} parent=1 // loop_pre_header
      _
    $region3: #{_lambda_.1} parent=1 // loop_header
      %s22 = sphi 0, %s26
      %p23 = scmp.ge.s32.totalorder %s22, 4
      %s30 = sphi 0, %s30
      %s32 = sphi 0, %s30
      %s33 = sphi 0, %s32
      %s47 = sphi 0, %s33
      %s51 = sphi 0, %s51
      %s53 = sphi 0, %s51
      %s54 = sphi 0, %s53
      %s68 = sphi 0, %s54
      %s72 = sphi 0, %s72
      %s74 = sphi 0, %s72
      %s75 = sphi 0, %s74
      %s89 = sphi 0, %s75
      %s93 = sphi 0, %s93
      %s95 = sphi 0, %s93
      %s96 = sphi 0, %s95
      %s110 = sphi 0, %s96
      %s116 = sphi 0, %s118
      %s119 = sphi 0, %s116
      %s120 = sphi 0, %s119
      %s136 = sphi 0, %s120
      %s140 = sphi 0, %s140
      %s142 = sphi 0, %s140
      %s143 = sphi 0, %s142
      %s157 = sphi 0, %s143
      %s161 = sphi 0, %s161
      %s163 = sphi 0, %s161
      %s164 = sphi 0, %s163
      %s178 = sphi 0, %s164
      %s182 = sphi 0, %s182
      %s184 = sphi 0, %s182
      %s185 = sphi 0, %s184
      %s199 = sphi 0, %s185
    $region4: #{_lambda_.1} parent=1 // loop_header_branch
      %25 = sbr.rel (%p23) target = $region8
    $region5: #{_lambda_.1} parent=1 // loop_body
      %s27 = ssub.s32 %s22, 1
      %s28 = ssub.s32 %s22, 2
      %s29 = sadd.s32 %s22, 1
      %s31 = sadd.s32 %s30, 1
      %p34 = scmp.eq.s32.totalorder %s22, 1
      %p35 = scmp.ne.s32.totalorder %s30, %s32
      %p36 = scmp.eq.s32.totalorder %s22, 0
      %p37 = por %p35, %p36
      %p38 = scmp.ne.s32.totalorder %s30, %s32
      %p39 = scmp.eq.s32.totalorder %s27, 1
      %p40 = por %p38, %p39
      %p41 = scmp.ne.s32.totalorder %s32, %s33
      %p42 = scmp.eq.s32.totalorder %s27, 0
      %p43 = por %p41, %p42
      %p44 = scmp.ne.s32.totalorder %s32, %s33
      %p45 = scmp.eq.s32.totalorder %s28, 1
      %p46 = por %p44, %p45
      %p48 = scmp.ne.s32.totalorder %s33, %s47
      %p49 = scmp.eq.s32.totalorder %s28, 0
      %p50 = por %p48, %p49
      %s52 = sadd.s32 %s51, 1
      %p55 = scmp.eq.s32.totalorder %s22, 1
      %p56 = scmp.ne.s32.totalorder %s51, %s53
      %p57 = scmp.eq.s32.totalorder %s22, 0
      %p58 = por %p56, %p57
      %p59 = scmp.ne.s32.totalorder %s51, %s53
      %p60 = scmp.eq.s32.totalorder %s27, 1
      %p61 = por %p59, %p60
      %p62 = scmp.ne.s32.totalorder %s53, %s54
      %p63 = scmp.eq.s32.totalorder %s27, 0
      %p64 = por %p62, %p63
      %p65 = scmp.ne.s32.totalorder %s53, %s54
      %p66 = scmp.eq.s32.totalorder %s28, 1
      %p67 = por %p65, %p66
      %p69 = scmp.ne.s32.totalorder %s54, %s68
      %p70 = scmp.eq.s32.totalorder %s28, 0
      %p71 = por %p69, %p70
      %s73 = sadd.s32 %s72, 1
      %p76 = scmp.eq.s32.totalorder %s22, 1
      %p77 = scmp.ne.s32.totalorder %s72, %s74
      %p78 = scmp.eq.s32.totalorder %s22, 0
      %p79 = por %p77, %p78
      %p80 = scmp.ne.s32.totalorder %s72, %s74
      %p81 = scmp.eq.s32.totalorder %s27, 1
      %p82 = por %p80, %p81
      %p83 = scmp.ne.s32.totalorder %s74, %s75
      %p84 = scmp.eq.s32.totalorder %s27, 0
      %p85 = por %p83, %p84
      %p86 = scmp.ne.s32.totalorder %s74, %s75
      %p87 = scmp.eq.s32.totalorder %s28, 1
      %p88 = por %p86, %p87
      %p90 = scmp.ne.s32.totalorder %s75, %s89
      %p91 = scmp.eq.s32.totalorder %s28, 0
      %p92 = por %p90, %p91
      %s94 = sadd.s32 %s93, 1
      %p97 = scmp.eq.s32.totalorder %s22, 1
      %p98 = scmp.ne.s32.totalorder %s93, %s95
      %p99 = scmp.eq.s32.totalorder %s22, 0
      %p100 = por %p98, %p99
      %p101 = scmp.ne.s32.totalorder %s93, %s95
      %p102 = scmp.eq.s32.totalorder %s27, 1
      %p103 = por %p101, %p102
      %p104 = scmp.ne.s32.totalorder %s95, %s96
      %p105 = scmp.eq.s32.totalorder %s27, 0
      %p106 = por %p104, %p105
      %p107 = scmp.ne.s32.totalorder %s95, %s96
      %p108 = scmp.eq.s32.totalorder %s28, 1
      %p109 = por %p107, %p108
      %p111 = scmp.ne.s32.totalorder %s96, %s110
      %p112 = scmp.eq.s32.totalorder %s28, 0
      %p113 = por %p111, %p112
      %s114 = ssub.s32 %s22, %s29
      %p115 = scmp.eq.s32.totalorder %s114, 0
      %s117 = sadd.s32 %s116, 1
      %s118 = scalar_select %p115, %s116, %s117
      %p121 = pneg %p115
      %p122 = scmp.eq.s32.totalorder %s22, 1
      %p123 = por %p121, %p122
      %p124 = scmp.ne.s32.totalorder %s116, %s119
      %p125 = scmp.eq.s32.totalorder %s22, 0
      %p126 = por %p124, %p125
      %p127 = scmp.ne.s32.totalorder %s116, %s119
      %p128 = scmp.eq.s32.totalorder %s27, 1
      %p129 = por %p127, %p128
      %p130 = scmp.ne.s32.totalorder %s119, %s120
      %p131 = scmp.eq.s32.totalorder %s27, 0
      %p132 = por %p130, %p131
      %p133 = scmp.ne.s32.totalorder %s119, %s120
      %p134 = scmp.eq.s32.totalorder %s28, 1
      %p135 = por %p133, %p134
      %p137 = scmp.ne.s32.totalorder %s120, %s136
      %p138 = scmp.eq.s32.totalorder %s28, 0
      %p139 = por %p137, %p138
      %s141 = sadd.s32 %s140, 1
      %p144 = scmp.eq.s32.totalorder %s22, 1
      %p145 = scmp.ne.s32.totalorder %s140, %s142
      %p146 = scmp.eq.s32.totalorder %s22, 0
      %p147 = por %p145, %p146
      %p148 = scmp.ne.s32.totalorder %s140, %s142
      %p149 = scmp.eq.s32.totalorder %s27, 1
      %p150 = por %p148, %p149
      %p151 = scmp.ne.s32.totalorder %s142, %s143
      %p152 = scmp.eq.s32.totalorder %s27, 0
      %p153 = por %p151, %p152
      %p154 = scmp.ne.s32.totalorder %s142, %s143
      %p155 = scmp.eq.s32.totalorder %s28, 1
      %p156 = por %p154, %p155
      %p158 = scmp.ne.s32.totalorder %s143, %s157
      %p159 = scmp.eq.s32.totalorder %s28, 0
      %p160 = por %p158, %p159
      %s162 = sadd.s32 %s161, 1
      %p165 = scmp.eq.s32.totalorder %s22, 1
      %p166 = scmp.ne.s32.totalorder %s161, %s163
      %p167 = scmp.eq.s32.totalorder %s22, 0
      %p168 = por %p166, %p167
      %p169 = scmp.ne.s32.totalorder %s161, %s163
      %p170 = scmp.eq.s32.totalorder %s27, 1
      %p171 = por %p169, %p170
      %p172 = scmp.ne.s32.totalorder %s163, %s164
      %p173 = scmp.eq.s32.totalorder %s27, 0
      %p174 = por %p172, %p173
      %p175 = scmp.ne.s32.totalorder %s163, %s164
      %p176 = scmp.eq.s32.totalorder %s28, 1
      %p177 = por %p175, %p176
      %p179 = scmp.ne.s32.totalorder %s164, %s178
      %p180 = scmp.eq.s32.totalorder %s28, 0
      %p181 = por %p179, %p180
      %s183 = sadd.s32 %s182, 1
      %p186 = scmp.eq.s32.totalorder %s22, 1
      %p187 = scmp.ne.s32.totalorder %s182, %s184
      %p188 = scmp.eq.s32.totalorder %s22, 0
      %p189 = por %p187, %p188
      %p190 = scmp.ne.s32.totalorder %s182, %s184
      %p191 = scmp.eq.s32.totalorder %s27, 1
      %p192 = por %p190, %p191
      %p193 = scmp.ne.s32.totalorder %s184, %s185
      %p194 = scmp.eq.s32.totalorder %s27, 0
      %p195 = por %p193, %p194
      %p196 = scmp.ne.s32.totalorder %s184, %s185
      %p197 = scmp.eq.s32.totalorder %s28, 1
      %p198 = por %p196, %p197
      %p200 = scmp.ne.s32.totalorder %s185, %s199
      %p201 = scmp.eq.s32.totalorder %s28, 0
      %p202 = por %p200, %p201
      %p203 = scmp.le.s32.totalorder 1, %s22
      %p204 = scmp.lt.s32.totalorder %s22, 3
      %p205 = pnand %p203, %p204
      %p206 = pneg %p205
      // Predicated region
      $region9: #{_lambda_.1} parent=5 // pred_check
        _
      $region10: #{_lambda_.1} parent=5 // pred_check_branch
        %208 = sbr.rel (%p205) target = $region12
      $region11: #{_lambda_.1} parent=5 // pred_region
        %s209 = ssub.s32 %s22, 1
        // Predicated region
        $region13: #{_lambda_.1} parent=11 // pred_check
          %p210 = pneg %p43
        $region14: #{_lambda_.1} parent=11 // pred_check_branch
          %212 = sbr.rel (%p210) target = $region16
        $region15: #{_lambda_.1} parent=11 // pred_region
          %s214 = ssub.s32 1024, 1024
          %215 = vsyncadd [#allocation7], %s214
          %s216 = sshll.u32 [#allocation6], 4
          %s217 = int_to_ptr.vmem [resolvable:$true] %s216
          %222 = dma.hbm_to_vmem [thread:$0]  %s1, 1024, %s217, [#allocation7], 64, 64, 4
        $region16: #{_lambda_.1} parent=11 // pred_fallthru
          _
        // Predicated region
        $region17: #{_lambda_.1} parent=11 // pred_check
          %p223 = pneg %p64
        $region18: #{_lambda_.1} parent=11 // pred_check_branch
          %225 = sbr.rel (%p223) target = $region20
        $region19: #{_lambda_.1} parent=11 // pred_region
          _
        $region20: #{_lambda_.1} parent=11 // pred_fallthru
          _
        // Predicated region
        $region21: #{_lambda_.1} parent=11 // pred_check
          %p226 = pneg %p85
        $region22: #{_lambda_.1} parent=11 // pred_check_branch
          %228 = sbr.rel (%p226) target = $region24
        $region23: #{_lambda_.1} parent=11 // pred_region
          %s230 = ssub.s32 1024, 1024
          %231 = vsyncadd [#allocation9], %s230
          %s232 = sshll.u32 [#allocation8], 4
          %s233 = int_to_ptr.vmem [resolvable:$true] %s232
          %238 = dma.hbm_to_vmem [thread:$0]  %s3, 1024, %s233, [#allocation9], 64, 64, 4
        $region24: #{_lambda_.1} parent=11 // pred_fallthru
          _
        // Predicated region
        $region25: #{_lambda_.1} parent=11 // pred_check
          %p239 = pneg %p106
        $region26: #{_lambda_.1} parent=11 // pred_check_branch
          %241 = sbr.rel (%p239) target = $region28
        $region27: #{_lambda_.1} parent=11 // pred_region
          _
        $region28: #{_lambda_.1} parent=11 // pred_fallthru
          _
        // Predicated region
        $region29: #{_lambda_.1} parent=11 // pred_check
          %p242 = pneg %p153
        $region30: #{_lambda_.1} parent=11 // pred_check_branch
          %244 = sbr.rel (%p242) target = $region32
        $region31: #{_lambda_.1} parent=11 // pred_region
          %s246 = ssub.s32 1024, 1024
          %247 = vsyncadd [#allocation9], %s246
          %s248 = sshll.u32 [#allocation10], 4
          %s249 = int_to_ptr.vmem [resolvable:$true] %s248
          %254 = dma.hbm_to_vmem [thread:$0]  %s6, 1024, %s249, [#allocation9], 64, 64, 4
        $region32: #{_lambda_.1} parent=11 // pred_fallthru
          _
        // Predicated region
        $region33: #{_lambda_.1} parent=11 // pred_check
          %p255 = pneg %p174
        $region34: #{_lambda_.1} parent=11 // pred_check_branch
          %257 = sbr.rel (%p255) target = $region36
        $region35: #{_lambda_.1} parent=11 // pred_region
          _
        $region36: #{_lambda_.1} parent=11 // pred_fallthru
          _
      $region12: #{_lambda_.1} parent=5 // pred_fallthru
        _
      %p258 = scmp.lt.s32.totalorder %s22, 2
      // Predicated region
      $region37: #{_lambda_.1} parent=5 // pred_check
        %p259 = pneg %p258
      $region38: #{_lambda_.1} parent=5 // pred_check_branch
        %261 = sbr.rel (%p259) target = $region40
      $region39: #{_lambda_.1} parent=5 // pred_region
        // Predicated region
        $region41: #{_lambda_.1} parent=39 // pred_check
          %p262 = pneg %p126
        $region42: #{_lambda_.1} parent=39 // pred_check_branch
          %264 = sbr.rel (%p262) target = $region44
        $region43: #{_lambda_.1} parent=39 // pred_region
          %p265 = scmp.lt.s32.totalorder %s22, 1
          %s266 = scalar_select %p265, %s22, 1
          %s267 = smul.addr %s266, 16
          %s268 = smul.addr %s267, 4
          %s269 = scalar_lea.vmem %s5, %s268
        $region44: #{_lambda_.1} parent=39 // pred_fallthru
          _
      $region40: #{_lambda_.1} parent=5 // pred_fallthru
        _
      %p270 = scmp.le.s32.totalorder 1, %s22
      %p271 = scmp.lt.s32.totalorder %s22, 3
      %p272 = pnand %p270, %p271
      %p273 = pneg %p272
      // Predicated region
      $region45: #{_lambda_.1} parent=5 // pred_check
        _
      $region46: #{_lambda_.1} parent=5 // pred_check_branch
        %275 = sbr.rel (%p272) target = $region48
      $region47: #{_lambda_.1} parent=5 // pred_region
        %s276 = ssub.s32 %s22, 1
        // Predicated region
        $region49: #{_lambda_.1} parent=47 // pred_check
          %p277 = pneg %p43
        $region50: #{_lambda_.1} parent=47 // pred_check_branch
          %279 = sbr.rel (%p277) target = $region52
        $region51: #{_lambda_.1} parent=47 // pred_region
          %280 = dma.done [#allocation7], 1024
        $region52: #{_lambda_.1} parent=47 // pred_fallthru
          _
        // Predicated region
        $region53: #{_lambda_.1} parent=47 // pred_check
          %p281 = pneg %p85
        $region54: #{_lambda_.1} parent=47 // pred_check_branch
          %283 = sbr.rel (%p281) target = $region56
        $region55: #{_lambda_.1} parent=47 // pred_region
          %284 = dma.done [#allocation9], 1024
        $region56: #{_lambda_.1} parent=47 // pred_fallthru
          _
        // Predicated region
        $region57: #{_lambda_.1} parent=47 // pred_check
          %p285 = pneg %p153
        $region58: #{_lambda_.1} parent=47 // pred_check_branch
          %287 = sbr.rel (%p285) target = $region60
        $region59: #{_lambda_.1} parent=47 // pred_region
          %288 = dma.done [#allocation9], 1024
        $region60: #{_lambda_.1} parent=47 // pred_fallthru
          _
        %p289 = pneg %p43
        %p290 = pneg %p40
        %p291 = pneg %p64
        %p292 = pneg %p61
        %p293 = pneg %p85
        %p294 = pneg %p82
        %p295 = pneg %p106
        %p296 = pneg %p103
        %p297 = scmp.lt.s32.totalorder %s27, 1
        %s298 = scalar_select %p297, %s27, 1
        %s299 = smul.addr %s298, 16
        %s300 = smul.addr %s299, 4
        %s301 = scalar_lea.vmem %s5, %s300
        %p302 = pneg %p132
        %p303 = pneg %p129
        %p304 = pneg %p153
        %p305 = pneg %p150
        %p306 = pneg %p174
        %p307 = pneg %p171
        %p308 = pneg %p195
        %p309 = pneg %p192
        %p310 = scmp.lt.s32.totalorder %s27, 1
        %s311 = scalar_select %p310, %s27, 1
        %s312 = smul.addr %s311, 16
        %s313 = smul.addr %s312, 4
        %s314 = scalar_lea.vmem %s5, %s313
        %p316 = scmp.eq.s32.totalorder %s27, 0
        // Predicated region
        $region61: #{_lambda_.1} parent=47 // pred_check
          %p317 = pneg %p316
        $region62: #{_lambda_.1} parent=47 // pred_check_branch
          %319 = sbr.rel (%p317) target = $region64
        $region63: #{_lambda_.1} parent=47 // pred_region
          %v320 = vld [vmem:[%s2] sm:$0xf]
          %v321 = vld [vmem:[%s2 + $0x4] sm:$0xf]
          %v322 = vld [vmem:[%s2 + $0x8] sm:$0xf]
          %v323 = vld [vmem:[%s2 + $0xc] sm:$0xf]
          %v324 = vld [vmem:[%s2 + $0x10] sm:$0xf]
          %v325 = vld [vmem:[%s2 + $0x14] sm:$0xf]
          %v326 = vld [vmem:[%s2 + $0x18] sm:$0xf]
          %v327 = vld [vmem:[%s2 + $0x1c] sm:$0xf]
          %v328 = vld [vmem:[%s2 + $0x20] sm:$0xf]
          %v329 = vld [vmem:[%s2 + $0x24] sm:$0xf]
          %v330 = vld [vmem:[%s2 + $0x28] sm:$0xf]
          %v331 = vld [vmem:[%s2 + $0x2c] sm:$0xf]
          %v332 = vld [vmem:[%s2 + $0x30] sm:$0xf]
          %v333 = vld [vmem:[%s2 + $0x34] sm:$0xf]
          %v334 = vld [vmem:[%s2 + $0x38] sm:$0xf]
          %v335 = vld [vmem:[%s2 + $0x3c] sm:$0xf]
          %v336 = vld [vmem:[#allocation8] sm:$0xf]
          %v337 = vld [vmem:[#allocation8 + $0x4] sm:$0xf]
          %v338 = vld [vmem:[#allocation8 + $0x8] sm:$0xf]
          %v339 = vld [vmem:[#allocation8 + $0xc] sm:$0xf]
          %v340 = vld [vmem:[#allocation8 + $0x10] sm:$0xf]
          %v341 = vld [vmem:[#allocation8 + $0x14] sm:$0xf]
          %v342 = vld [vmem:[#allocation8 + $0x18] sm:$0xf]
          %v343 = vld [vmem:[#allocation8 + $0x1c] sm:$0xf]
          %v344 = vld [vmem:[#allocation8 + $0x20] sm:$0xf]
          %v345 = vld [vmem:[#allocation8 + $0x24] sm:$0xf]
          %v346 = vld [vmem:[#allocation8 + $0x28] sm:$0xf]
          %v347 = vld [vmem:[#allocation8 + $0x2c] sm:$0xf]
          %v348 = vld [vmem:[#allocation8 + $0x30] sm:$0xf]
          %v349 = vld [vmem:[#allocation8 + $0x34] sm:$0xf]
          %v350 = vld [vmem:[#allocation8 + $0x38] sm:$0xf]
          %v351 = vld [vmem:[#allocation8 + $0x3c] sm:$0xf]
          %v352 = vld [vmem:[%s4] sm:$0x1]
          %v354 = vlaneseq
          %v355 = vshrl.u32 %v354, 7
          %v356 = vsub.s32 0, %v355
          %v357 = vrot.slane %v352, %v356
          %v375 = vunpack.c.l.b16 %v320
          %v376 = vunpack.c.l.b16 %v321
          %v377 = vunpack.c.l.b16 %v322
          %v378 = vunpack.c.l.b16 %v323
          %v379 = vunpack.c.l.b16 %v324
          %v380 = vunpack.c.l.b16 %v325
          %v381 = vunpack.c.l.b16 %v326
          %v382 = vunpack.c.l.b16 %v327
          %v383 = vunpack.c.l.b16 %v328
          %v384 = vunpack.c.l.b16 %v329
          %v385 = vunpack.c.l.b16 %v330
          %v386 = vunpack.c.l.b16 %v331
          %v387 = vunpack.c.l.b16 %v332
          %v388 = vunpack.c.l.b16 %v333
          %v389 = vunpack.c.l.b16 %v334
          %v390 = vunpack.c.l.b16 %v335
          %v391 = vpack.c.b16 %v376, %v375
          %v392 = vpack.c.b16 %v378, %v377
          %v393 = vpack.c.b16 %v380, %v379
          %v394 = vpack.c.b16 %v382, %v381
          %v395 = vpack.c.b16 %v384, %v383
          %v396 = vpack.c.b16 %v386, %v385
          %v397 = vpack.c.b16 %v388, %v387
          %v398 = vpack.c.b16 %v390, %v389
          %v423 = vunpack.c.l.b16 %v336
          %v424 = vunpack.c.l.b16 %v337
          %v425 = vunpack.c.l.b16 %v338
          %v426 = vunpack.c.l.b16 %v339
          %v427 = vunpack.c.l.b16 %v340
          %v428 = vunpack.c.l.b16 %v341
          %v429 = vunpack.c.l.b16 %v342
          %v430 = vunpack.c.l.b16 %v343
          %v431 = vunpack.c.l.b16 %v344
          %v432 = vunpack.c.l.b16 %v345
          %v433 = vunpack.c.l.b16 %v346
          %v434 = vunpack.c.l.b16 %v347
          %v435 = vunpack.c.l.b16 %v348
          %v436 = vunpack.c.l.b16 %v349
          %v437 = vunpack.c.l.b16 %v350
          %v438 = vunpack.c.l.b16 %v351
          %v439 = vpack.c.b16 %v424, %v423
          %v440 = vpack.c.b16 %v426, %v425
          %v441 = vpack.c.b16 %v428, %v427
          %v442 = vpack.c.b16 %v430, %v429
          %v443 = vpack.c.b16 %v432, %v431
          %v444 = vpack.c.b16 %v434, %v433
          %v445 = vpack.c.b16 %v436, %v435
          %v446 = vpack.c.b16 %v438, %v437
          %455 = vmatprep.subr.bf16.mxu0 0
          %456 = vmatpush1.bf16.msra.mxu0 %v439
          %457 = vmatprep.subr.bf16.mxu0 0
          %458 = vmatpush1.bf16.msra.mxu0 %v440
          %459 = vmatprep.subr.bf16.mxu0 0
          %460 = vmatpush1.bf16.msra.mxu0 %v441
          %461 = vmatprep.subr.bf16.mxu0 0
          %462 = vmatpush1.bf16.msra.mxu0 %v442
          %463 = vmatprep.subr.bf16.mxu0 0
          %464 = vmatpush1.bf16.msra.mxu0 %v443
          %465 = vmatprep.subr.bf16.mxu0 0
          %466 = vmatpush1.bf16.msra.mxu0 %v444
          %467 = vmatprep.subr.bf16.mxu0 0
          %468 = vmatpush1.bf16.msra.mxu0 %v445
          %469 = vmatprep.subr.bf16.mxu0 0
          %470 = vmatpush1.bf16.msra.mxu0 %v446
          %471 = vmatprep.subr.bf16.mxu0 0
          %472 = vmatpush1.bf16.msra.mxu0 0
          %473 = vmatprep.subr.bf16.mxu0 0
          %474 = vmatpush1.bf16.msra.mxu0 0
          %475 = vmatprep.subr.bf16.mxu0 0
          %476 = vmatpush1.bf16.msra.mxu0 0
          %477 = vmatprep.subr.bf16.mxu0 0
          %478 = vmatpush1.bf16.msra.mxu0 0
          %479 = vmatprep.subr.bf16.mxu0 0
          %480 = vmatpush1.bf16.msra.mxu0 0
          %481 = vmatprep.subr.bf16.mxu0 0
          %482 = vmatpush1.bf16.msra.mxu0 0
          %483 = vmatprep.subr.bf16.mxu0 0
          %484 = vmatpush1.bf16.msra.mxu0 0
          %485 = vmatprep.subr.bf16.mxu0 0
          %486 = vmatpush1.bf16.msra.mxu0 0
          %487 = vmatprep.mubr.bf16.mxu0 0
          %488 = vmatmul.mubr.bf16.gmra.mrb[0].mxu0 %v391
          %v489 = vpop.f32.mrb[0].mxu0
          %v490 = vadd.f32 %v357, %v489
          %v491 = vpop.f32.mrb[0].mxu0
          %v492 = vpop.f32.mrb[0].mxu0
          %v493 = vadd.f32 %v357, %v492
          %v494 = vpop.f32.mrb[0].mxu0
          %495 = vmatprep.mubr.bf16.mxu0 0
          %496 = vmatmul.mubr.bf16.gmra.mrb[0].mxu0 %v392
          %v497 = vpop.f32.mrb[0].mxu0
          %v498 = vadd.f32 %v357, %v497
          %v499 = vpop.f32.mrb[0].mxu0
          %v500 = vpop.f32.mrb[0].mxu0
          %v501 = vadd.f32 %v357, %v500
          %v502 = vpop.f32.mrb[0].mxu0
          %503 = vmatprep.mubr.bf16.mxu0 0
          %504 = vmatmul.mubr.bf16.gmra.mrb[0].mxu0 %v393
          %v505 = vpop.f32.mrb[0].mxu0
          %v506 = vadd.f32 %v357, %v505
          %v507 = vpop.f32.mrb[0].mxu0
          %v508 = vpop.f32.mrb[0].mxu0
          %v509 = vadd.f32 %v357, %v508
          %v510 = vpop.f32.mrb[0].mxu0
          %511 = vmatprep.mubr.bf16.mxu0 0
          %512 = vmatmul.mubr.bf16.gmra.mrb[0].mxu0 %v394
          %v513 = vpop.f32.mrb[0].mxu0
          %v514 = vadd.f32 %v357, %v513
          %v515 = vpop.f32.mrb[0].mxu0
          %v516 = vpop.f32.mrb[0].mxu0
          %v517 = vadd.f32 %v357, %v516
          %v518 = vpop.f32.mrb[0].mxu0
          %519 = vmatprep.mubr.bf16.mxu0 0
          %520 = vmatmul.mubr.bf16.gmra.mrb[0].mxu0 %v395
          %v521 = vpop.f32.mrb[0].mxu0
          %v522 = vadd.f32 %v357, %v521
          %v523 = vpop.f32.mrb[0].mxu0
          %v524 = vpop.f32.mrb[0].mxu0
          %v525 = vadd.f32 %v357, %v524
          %v526 = vpop.f32.mrb[0].mxu0
          %527 = vmatprep.mubr.bf16.mxu0 0
          %528 = vmatmul.mubr.bf16.gmra.mrb[0].mxu0 %v396
          %v529 = vpop.f32.mrb[0].mxu0
          %v530 = vadd.f32 %v357, %v529
          %v531 = vpop.f32.mrb[0].mxu0
          %v532 = vpop.f32.mrb[0].mxu0
          %v533 = vadd.f32 %v357, %v532
          %v534 = vpop.f32.mrb[0].mxu0
          %535 = vmatprep.mubr.bf16.mxu0 0
          %536 = vmatmul.mubr.bf16.gmra.mrb[0].mxu0 %v397
          %v537 = vpop.f32.mrb[0].mxu0
          %v538 = vadd.f32 %v357, %v537
          %v539 = vpop.f32.mrb[0].mxu0
          %v540 = vpop.f32.mrb[0].mxu0
          %v541 = vadd.f32 %v357, %v540
          %v542 = vpop.f32.mrb[0].mxu0
          %543 = vmatprep.mubr.bf16.mxu0 0
          %544 = vmatmul.mubr.bf16.gmra.mrb[0].mxu0 %v398
          %v545 = vpop.f32.mrb[0].mxu0
          %v546 = vadd.f32 %v357, %v545
          %v547 = vpop.f32.mrb[0].mxu0
          %v548 = vpop.f32.mrb[0].mxu0
          %v549 = vadd.f32 %v357, %v548
          %v550 = vpop.f32.mrb[0].mxu0
          %551 = vdwg.mxu0
          %v552 = vmax.f32 %v490, 0.0
          %v553 = vmax.f32 %v493, 0.0
          %v554 = vmax.f32 %v498, 0.0
          %v555 = vmax.f32 %v501, 0.0
          %v556 = vmax.f32 %v506, 0.0
          %v557 = vmax.f32 %v509, 0.0
          %v558 = vmax.f32 %v514, 0.0
          %v559 = vmax.f32 %v517, 0.0
          %v560 = vmax.f32 %v522, 0.0
          %v561 = vmax.f32 %v525, 0.0
          %v562 = vmax.f32 %v530, 0.0
          %v563 = vmax.f32 %v533, 0.0
          %v564 = vmax.f32 %v538, 0.0
          %v565 = vmax.f32 %v541, 0.0
          %v566 = vmax.f32 %v546, 0.0
          %v567 = vmax.f32 %v549, 0.0
          %568 = vst [vmem:[#allocation3] sm:$0xff] %v552
          %569 = vst [vmem:[#allocation3 + $0x8] sm:$0xff] %v553
          %570 = vst [vmem:[#allocation3 + $0x10] sm:$0xff] %v554
          %571 = vst [vmem:[#allocation3 + $0x18] sm:$0xff] %v555
          %572 = vst [vmem:[#allocation3 + $0x20] sm:$0xff] %v556
          %573 = vst [vmem:[#allocation3 + $0x28] sm:$0xff] %v557
          %574 = vst [vmem:[#allocation3 + $0x30] sm:$0xff] %v558
          %575 = vst [vmem:[#allocation3 + $0x38] sm:$0xff] %v559
          %576 = vst [vmem:[#allocation3 + $0x40] sm:$0xff] %v560
          %577 = vst [vmem:[#allocation3 + $0x48] sm:$0xff] %v561
          %578 = vst [vmem:[#allocation3 + $0x50] sm:$0xff] %v562
          %579 = vst [vmem:[#allocation3 + $0x58] sm:$0xff] %v563
          %580 = vst [vmem:[#allocation3 + $0x60] sm:$0xff] %v564
          %581 = vst [vmem:[#allocation3 + $0x68] sm:$0xff] %v565
          %582 = vst [vmem:[#allocation3 + $0x70] sm:$0xff] %v566
          %583 = vst [vmem:[#allocation3 + $0x78] sm:$0xff] %v567
          %v584 = vpack.c.bf16 %v553, %v552
          %v585 = vpack.c.bf16 %v555, %v554
          %v586 = vpack.c.bf16 %v557, %v556
          %v587 = vpack.c.bf16 %v559, %v558
          %v588 = vpack.c.bf16 %v561, %v560
          %v589 = vpack.c.bf16 %v563, %v562
          %v590 = vpack.c.bf16 %v565, %v564
          %v591 = vpack.c.bf16 %v567, %v566
          %592 = vst [vmem:[#allocation2] sm:$0xff] %v584
          %593 = vst [vmem:[#allocation2 + $0x8] sm:$0xff] %v585
          %594 = vst [vmem:[#allocation2 + $0x10] sm:$0xff] %v586
          %595 = vst [vmem:[#allocation2 + $0x18] sm:$0xff] %v587
          %596 = vst [vmem:[#allocation2 + $0x20] sm:$0xff] %v588
          %597 = vst [vmem:[#allocation2 + $0x28] sm:$0xff] %v589
          %598 = vst [vmem:[#allocation2 + $0x30] sm:$0xff] %v590
          %599 = vst [vmem:[#allocation2 + $0x38] sm:$0xff] %v591
        $region64: #{_lambda_.1} parent=47 // pred_fallthru
          _
        %s600 = sld [smem:[#allocation5 + %s27]]
        %v601 = vld [vmem:[#allocation6] sm:$0xf]
        %v602 = vld [vmem:[#allocation6 + $0x4] sm:$0xf]
        %v603 = vld [vmem:[#allocation6 + $0x8] sm:$0xf]
        %v604 = vld [vmem:[#allocation6 + $0xc] sm:$0xf]
        %v605 = vld [vmem:[#allocation6 + $0x10] sm:$0xf]
        %v606 = vld [vmem:[#allocation6 + $0x14] sm:$0xf]
        %v607 = vld [vmem:[#allocation6 + $0x18] sm:$0xf]
        %v608 = vld [vmem:[#allocation6 + $0x1c] sm:$0xf]
        %v609 = vld [vmem:[#allocation6 + $0x20] sm:$0xf]
        %v610 = vld [vmem:[#allocation6 + $0x24] sm:$0xf]
        %v611 = vld [vmem:[#allocation6 + $0x28] sm:$0xf]
        %v612 = vld [vmem:[#allocation6 + $0x2c] sm:$0xf]
        %v613 = vld [vmem:[#allocation6 + $0x30] sm:$0xf]
        %v614 = vld [vmem:[#allocation6 + $0x34] sm:$0xf]
        %v615 = vld [vmem:[#allocation6 + $0x38] sm:$0xf]
        %v616 = vld [vmem:[#allocation6 + $0x3c] sm:$0xf]
        %v617 = vld [vmem:[#allocation2] sm:$0xff]
        %v618 = vld [vmem:[#allocation2 + $0x8] sm:$0xff]
        %v619 = vld [vmem:[#allocation2 + $0x10] sm:$0xff]
        %v620 = vld [vmem:[#allocation2 + $0x18] sm:$0xff]
        %v621 = vld [vmem:[#allocation2 + $0x20] sm:$0xff]
        %v622 = vld [vmem:[#allocation2 + $0x28] sm:$0xff]
        %v623 = vld [vmem:[#allocation2 + $0x30] sm:$0xff]
        %v624 = vld [vmem:[#allocation2 + $0x38] sm:$0xff]
        %v641 = vunpack.c.l.b16 %v601
        %v642 = vunpack.c.l.b16 %v602
        %v643 = vunpack.c.l.b16 %v603
        %v644 = vunpack.c.l.b16 %v604
        %v645 = vunpack.c.l.b16 %v605
        %v646 = vunpack.c.l.b16 %v606
        %v647 = vunpack.c.l.b16 %v607
        %v648 = vunpack.c.l.b16 %v608
        %v649 = vunpack.c.l.b16 %v609
        %v650 = vunpack.c.l.b16 %v610
        %v651 = vunpack.c.l.b16 %v611
        %v652 = vunpack.c.l.b16 %v612
        %v653 = vunpack.c.l.b16 %v613
        %v654 = vunpack.c.l.b16 %v614
        %v655 = vunpack.c.l.b16 %v615
        %v656 = vunpack.c.l.b16 %v616
        %v657 = vpack.c.b16 %v642, %v641
        %v658 = vpack.c.b16 %v644, %v643
        %v659 = vpack.c.b16 %v646, %v645
        %v660 = vpack.c.b16 %v648, %v647
        %v661 = vpack.c.b16 %v650, %v649
        %v662 = vpack.c.b16 %v652, %v651
        %v663 = vpack.c.b16 %v654, %v653
        %v664 = vpack.c.b16 %v656, %v655
        %673 = vmatprep.subr.bf16.mxu0 0
        %674 = vmatpush1.bf16.msra.mxu0 %v617
        %675 = vmatprep.subr.bf16.mxu0 0
        %676 = vmatpush1.bf16.msra.mxu0 %v618
        %677 = vmatprep.subr.bf16.mxu0 0
        %678 = vmatpush1.bf16.msra.mxu0 %v619
        %679 = vmatprep.subr.bf16.mxu0 0
        %680 = vmatpush1.bf16.msra.mxu0 %v620
        %681 = vmatprep.subr.bf16.mxu0 0
        %682 = vmatpush1.bf16.msra.mxu0 %v621
        %683 = vmatprep.subr.bf16.mxu0 0
        %684 = vmatpush1.bf16.msra.mxu0 %v622
        %685 = vmatprep.subr.bf16.mxu0 0
        %686 = vmatpush1.bf16.msra.mxu0 %v623
        %687 = vmatprep.subr.bf16.mxu0 0
        %688 = vmatpush1.bf16.msra.mxu0 %v624
        %689 = vmatprep.subr.bf16.mxu0 0
        %690 = vmatpush1.bf16.msra.mxu0 0
        %691 = vmatprep.subr.bf16.mxu0 0
        %692 = vmatpush1.bf16.msra.mxu0 0
        %693 = vmatprep.subr.bf16.mxu0 0
        %694 = vmatpush1.bf16.msra.mxu0 0
        %695 = vmatprep.subr.bf16.mxu0 0
        %696 = vmatpush1.bf16.msra.mxu0 0
        %697 = vmatprep.subr.bf16.mxu0 0
        %698 = vmatpush1.bf16.msra.mxu0 0
        %699 = vmatprep.subr.bf16.mxu0 0
        %700 = vmatpush1.bf16.msra.mxu0 0
        %701 = vmatprep.subr.bf16.mxu0 0
        %702 = vmatpush1.bf16.msra.mxu0 0
        %703 = vmatprep.subr.bf16.mxu0 0
        %704 = vmatpush1.bf16.msra.mxu0 0
        %705 = vmatprep.mubr.bf16.mxu0 0
        %706 = vmatmul.mubr.bf16.gmra.mrb[0].mxu0 %v657
        %v707 = vpop.f32.mrb[0].mxu0
        %v708 = vadd.f32 0.0, %v707
        %v709 = vpop.f32.mrb[0].mxu0
        %v710 = vpop.f32.mrb[0].mxu0
        %v711 = vadd.f32 0.0, %v710
        %v712 = vpop.f32.mrb[0].mxu0
        %713 = vmatprep.mubr.bf16.mxu0 0
        %714 = vmatmul.mubr.bf16.gmra.mrb[0].mxu0 %v658
        %v715 = vpop.f32.mrb[0].mxu0
        %v716 = vadd.f32 0.0, %v715
        %v717 = vpop.f32.mrb[0].mxu0
        %v718 = vpop.f32.mrb[0].mxu0
        %v719 = vadd.f32 0.0, %v718
        %v720 = vpop.f32.mrb[0].mxu0
        %721 = vmatprep.mubr.bf16.mxu0 0
        %722 = vmatmul.mubr.bf16.gmra.mrb[0].mxu0 %v659
        %v723 = vpop.f32.mrb[0].mxu0
        %v724 = vadd.f32 0.0, %v723
        %v725 = vpop.f32.mrb[0].mxu0
        %v726 = vpop.f32.mrb[0].mxu0
        %v727 = vadd.f32 0.0, %v726
        %v728 = vpop.f32.mrb[0].mxu0
        %729 = vmatprep.mubr.bf16.mxu0 0
        %730 = vmatmul.mubr.bf16.gmra.mrb[0].mxu0 %v660
        %v731 = vpop.f32.mrb[0].mxu0
        %v732 = vadd.f32 0.0, %v731
        %v733 = vpop.f32.mrb[0].mxu0
        %v734 = vpop.f32.mrb[0].mxu0
        %v735 = vadd.f32 0.0, %v734
        %v736 = vpop.f32.mrb[0].mxu0
        %737 = vmatprep.mubr.bf16.mxu0 0
        %738 = vmatmul.mubr.bf16.gmra.mrb[0].mxu0 %v661
        %v739 = vpop.f32.mrb[0].mxu0
        %v740 = vadd.f32 0.0, %v739
        %v741 = vpop.f32.mrb[0].mxu0
        %v742 = vpop.f32.mrb[0].mxu0
        %v743 = vadd.f32 0.0, %v742
        %v744 = vpop.f32.mrb[0].mxu0
        %745 = vmatprep.mubr.bf16.mxu0 0
        %746 = vmatmul.mubr.bf16.gmra.mrb[0].mxu0 %v662
        %v747 = vpop.f32.mrb[0].mxu0
        %v748 = vadd.f32 0.0, %v747
        %v749 = vpop.f32.mrb[0].mxu0
        %v750 = vpop.f32.mrb[0].mxu0
        %v751 = vadd.f32 0.0, %v750
        %v752 = vpop.f32.mrb[0].mxu0
        %753 = vmatprep.mubr.bf16.mxu0 0
        %754 = vmatmul.mubr.bf16.gmra.mrb[0].mxu0 %v663
        %v755 = vpop.f32.mrb[0].mxu0
        %v756 = vadd.f32 0.0, %v755
        %v757 = vpop.f32.mrb[0].mxu0
        %v758 = vpop.f32.mrb[0].mxu0
        %v759 = vadd.f32 0.0, %v758
        %v760 = vpop.f32.mrb[0].mxu0
        %761 = vmatprep.mubr.bf16.mxu0 0
        %762 = vmatmul.mubr.bf16.gmra.mrb[0].mxu0 %v664
        %v763 = vpop.f32.mrb[0].mxu0
        %v764 = vadd.f32 0.0, %v763
        %v765 = vpop.f32.mrb[0].mxu0
        %v766 = vpop.f32.mrb[0].mxu0
        %v767 = vadd.f32 0.0, %v766
        %v768 = vpop.f32.mrb[0].mxu0
        %769 = vdwg.mxu0
        %v770 = vmul.f32 %v708, 0.9
        %v771 = vmul.f32 %v711, 0.9
        %v772 = vmul.f32 %v716, 0.9
        %v773 = vmul.f32 %v719, 0.9
        %v774 = vmul.f32 %v724, 0.9
        %v775 = vmul.f32 %v727, 0.9
        %v776 = vmul.f32 %v732, 0.9
        %v777 = vmul.f32 %v735, 0.9
        %v778 = vmul.f32 %v740, 0.9
        %v779 = vmul.f32 %v743, 0.9
        %v780 = vmul.f32 %v748, 0.9
        %v781 = vmul.f32 %v751, 0.9
        %v782 = vmul.f32 %v756, 0.9
        %v783 = vmul.f32 %v759, 0.9
        %v784 = vmul.f32 %v764, 0.9
        %v785 = vmul.f32 %v767, 0.9
        %v786 = vld [vmem:[#allocation3] sm:$0xff]
        %v787 = vld [vmem:[#allocation3 + $0x8] sm:$0xff]
        %v788 = vld [vmem:[#allocation3 + $0x10] sm:$0xff]
        %v789 = vld [vmem:[#allocation3 + $0x18] sm:$0xff]
        %v790 = vld [vmem:[#allocation3 + $0x20] sm:$0xff]
        %v791 = vld [vmem:[#allocation3 + $0x28] sm:$0xff]
        %v792 = vld [vmem:[#allocation3 + $0x30] sm:$0xff]
        %v793 = vld [vmem:[#allocation3 + $0x38] sm:$0xff]
        %v794 = vld [vmem:[#allocation3 + $0x40] sm:$0xff]
        %v795 = vld [vmem:[#allocation3 + $0x48] sm:$0xff]
        %v796 = vld [vmem:[#allocation3 + $0x50] sm:$0xff]
        %v797 = vld [vmem:[#allocation3 + $0x58] sm:$0xff]
        %v798 = vld [vmem:[#allocation3 + $0x60] sm:$0xff]
        %v799 = vld [vmem:[#allocation3 + $0x68] sm:$0xff]
        %v800 = vld [vmem:[#allocation3 + $0x70] sm:$0xff]
        %v801 = vld [vmem:[#allocation3 + $0x78] sm:$0xff]
        %v802 = vmul.f32 %v786, 0.1
        %v803 = vmul.f32 %v787, 0.1
        %v804 = vmul.f32 %v788, 0.1
        %v805 = vmul.f32 %v789, 0.1
        %v806 = vmul.f32 %v790, 0.1
        %v807 = vmul.f32 %v791, 0.1
        %v808 = vmul.f32 %v792, 0.1
        %v809 = vmul.f32 %v793, 0.1
        %v810 = vmul.f32 %v794, 0.1
        %v811 = vmul.f32 %v795, 0.1
        %v812 = vmul.f32 %v796, 0.1
        %v813 = vmul.f32 %v797, 0.1
        %v814 = vmul.f32 %v798, 0.1
        %v815 = vmul.f32 %v799, 0.1
        %v816 = vmul.f32 %v800, 0.1
        %v817 = vmul.f32 %v801, 0.1
        %v818 = vadd.f32 %v770, %v802
        %v819 = vadd.f32 %v771, %v803
        %v820 = vadd.f32 %v772, %v804
        %v821 = vadd.f32 %v773, %v805
        %v822 = vadd.f32 %v774, %v806
        %v823 = vadd.f32 %v775, %v807
        %v824 = vadd.f32 %v776, %v808
        %v825 = vadd.f32 %v777, %v809
        %v826 = vadd.f32 %v778, %v810
        %v827 = vadd.f32 %v779, %v811
        %v828 = vadd.f32 %v780, %v812
        %v829 = vadd.f32 %v781, %v813
        %v830 = vadd.f32 %v782, %v814
        %v831 = vadd.f32 %v783, %v815
        %v832 = vadd.f32 %v784, %v816
        %v833 = vadd.f32 %v785, %v817
        %v834 = vpack.c.bf16 %v819, %v818
        %v835 = vpack.c.bf16 %v821, %v820
        %v836 = vpack.c.bf16 %v823, %v822
        %v837 = vpack.c.bf16 %v825, %v824
        %v838 = vpack.c.bf16 %v827, %v826
        %v839 = vpack.c.bf16 %v829, %v828
        %v840 = vpack.c.bf16 %v831, %v830
        %v841 = vpack.c.bf16 %v833, %v832
        %v842 = vld [vmem:[%s314] sm:$0xf]
        %v843 = vld [vmem:[%s314 + $0x4] sm:$0xf]
        %v844 = vld [vmem:[%s314 + $0x8] sm:$0xf]
        %v845 = vld [vmem:[%s314 + $0xc] sm:$0xf]
        %v846 = vld [vmem:[%s314 + $0x10] sm:$0xf]
        %v847 = vld [vmem:[%s314 + $0x14] sm:$0xf]
        %v848 = vld [vmem:[%s314 + $0x18] sm:$0xf]
        %v849 = vld [vmem:[%s314 + $0x1c] sm:$0xf]
        %v850 = vld [vmem:[%s314 + $0x20] sm:$0xf]
        %v851 = vld [vmem:[%s314 + $0x24] sm:$0xf]
        %v852 = vld [vmem:[%s314 + $0x28] sm:$0xf]
        %v853 = vld [vmem:[%s314 + $0x2c] sm:$0xf]
        %v854 = vld [vmem:[%s314 + $0x30] sm:$0xf]
        %v855 = vld [vmem:[%s314 + $0x34] sm:$0xf]
        %v856 = vld [vmem:[%s314 + $0x38] sm:$0xf]
        %v857 = vld [vmem:[%s314 + $0x3c] sm:$0xf]
        %v874 = vunpack.c.l.b16 %v842
        %v875 = vunpack.c.l.b16 %v843
        %v876 = vunpack.c.l.b16 %v844
        %v877 = vunpack.c.l.b16 %v845
        %v878 = vunpack.c.l.b16 %v846
        %v879 = vunpack.c.l.b16 %v847
        %v880 = vunpack.c.l.b16 %v848
        %v881 = vunpack.c.l.b16 %v849
        %v882 = vunpack.c.l.b16 %v850
        %v883 = vunpack.c.l.b16 %v851
        %v884 = vunpack.c.l.b16 %v852
        %v885 = vunpack.c.l.b16 %v853
        %v886 = vunpack.c.l.b16 %v854
        %v887 = vunpack.c.l.b16 %v855
        %v888 = vunpack.c.l.b16 %v856
        %v889 = vunpack.c.l.b16 %v857
        %v890 = vpack.c.b16 %v875, %v874
        %v891 = vpack.c.b16 %v877, %v876
        %v892 = vpack.c.b16 %v879, %v878
        %v893 = vpack.c.b16 %v881, %v880
        %v894 = vpack.c.b16 %v883, %v882
        %v895 = vpack.c.b16 %v885, %v884
        %v896 = vpack.c.b16 %v887, %v886
        %v897 = vpack.c.b16 %v889, %v888
        %906 = vmatprep.subr.bf16.mxu0 0
        %907 = vmatpush1.bf16.msra.mxu0 %v890
        %908 = vmatprep.subr.bf16.mxu0 0
        %909 = vmatpush1.bf16.msra.mxu0 %v891
        %910 = vmatprep.subr.bf16.mxu0 0
        %911 = vmatpush1.bf16.msra.mxu0 %v892
        %912 = vmatprep.subr.bf16.mxu0 0
        %913 = vmatpush1.bf16.msra.mxu0 %v893
        %914 = vmatprep.subr.bf16.mxu0 0
        %915 = vmatpush1.bf16.msra.mxu0 %v894
        %916 = vmatprep.subr.bf16.mxu0 0
        %917 = vmatpush1.bf16.msra.mxu0 %v895
        %918 = vmatprep.subr.bf16.mxu0 0
        %919 = vmatpush1.bf16.msra.mxu0 %v896
        %920 = vmatprep.subr.bf16.mxu0 0
        %921 = vmatpush1.bf16.msra.mxu0 %v897
        %922 = vmatprep.subr.bf16.mxu0 0
        %923 = vmatpush1.bf16.msra.mxu0 0
        %924 = vmatprep.subr.bf16.mxu0 0
        %925 = vmatpush1.bf16.msra.mxu0 0
        %926 = vmatprep.subr.bf16.mxu0 0
        %927 = vmatpush1.bf16.msra.mxu0 0
        %928 = vmatprep.subr.bf16.mxu0 0
        %929 = vmatpush1.bf16.msra.mxu0 0
        %930 = vmatprep.subr.bf16.mxu0 0
        %931 = vmatpush1.bf16.msra.mxu0 0
        %932 = vmatprep.subr.bf16.mxu0 0
        %933 = vmatpush1.bf16.msra.mxu0 0
        %934 = vmatprep.subr.bf16.mxu0 0
        %935 = vmatpush1.bf16.msra.mxu0 0
        %936 = vmatprep.subr.bf16.mxu0 0
        %937 = vmatpush1.bf16.msra.mxu0 0
        %938 = vmatprep.mubr.bf16.mxu0 0
        %939 = vmatmul.mubr.bf16.gmra.mrb[0].mxu0 %v834
        %v940 = vpop.f32.mrb[0].mxu0
        %v941 = vadd.f32 0.0, %v940
        %v942 = vpop.f32.mrb[0].mxu0
        %v943 = vpop.f32.mrb[0].mxu0
        %v944 = vadd.f32 0.0, %v943
        %v945 = vpop.f32.mrb[0].mxu0
        %946 = vmatprep.mubr.bf16.mxu0 0
        %947 = vmatmul.mubr.bf16.gmra.mrb[0].mxu0 %v835
        %v948 = vpop.f32.mrb[0].mxu0
        %v949 = vadd.f32 0.0, %v948
        %v950 = vpop.f32.mrb[0].mxu0
        %v951 = vpop.f32.mrb[0].mxu0
        %v952 = vadd.f32 0.0, %v951
        %v953 = vpop.f32.mrb[0].mxu0
        %954 = vmatprep.mubr.bf16.mxu0 0
        %955 = vmatmul.mubr.bf16.gmra.mrb[0].mxu0 %v836
        %v956 = vpop.f32.mrb[0].mxu0
        %v957 = vadd.f32 0.0, %v956
        %v958 = vpop.f32.mrb[0].mxu0
        %v959 = vpop.f32.mrb[0].mxu0
        %v960 = vadd.f32 0.0, %v959
        %v961 = vpop.f32.mrb[0].mxu0
        %962 = vmatprep.mubr.bf16.mxu0 0
        %963 = vmatmul.mubr.bf16.gmra.mrb[0].mxu0 %v837
        %v964 = vpop.f32.mrb[0].mxu0
        %v965 = vadd.f32 0.0, %v964
        %v966 = vpop.f32.mrb[0].mxu0
        %v967 = vpop.f32.mrb[0].mxu0
        %v968 = vadd.f32 0.0, %v967
        %v969 = vpop.f32.mrb[0].mxu0
        %970 = vmatprep.mubr.bf16.mxu0 0
        %971 = vmatmul.mubr.bf16.gmra.mrb[0].mxu0 %v838
        %v972 = vpop.f32.mrb[0].mxu0
        %v973 = vadd.f32 0.0, %v972
        %v974 = vpop.f32.mrb[0].mxu0
        %v975 = vpop.f32.mrb[0].mxu0
        %v976 = vadd.f32 0.0, %v975
        %v977 = vpop.f32.mrb[0].mxu0
        %978 = vmatprep.mubr.bf16.mxu0 0
        %979 = vmatmul.mubr.bf16.gmra.mrb[0].mxu0 %v839
        %v980 = vpop.f32.mrb[0].mxu0
        %v981 = vadd.f32 0.0, %v980
        %v982 = vpop.f32.mrb[0].mxu0
        %v983 = vpop.f32.mrb[0].mxu0
        %v984 = vadd.f32 0.0, %v983
        %v985 = vpop.f32.mrb[0].mxu0
        %986 = vmatprep.mubr.bf16.mxu0 0
        %987 = vmatmul.mubr.bf16.gmra.mrb[0].mxu0 %v840
        %v988 = vpop.f32.mrb[0].mxu0
        %v989 = vadd.f32 0.0, %v988
        %v990 = vpop.f32.mrb[0].mxu0
        %v991 = vpop.f32.mrb[0].mxu0
        %v992 = vadd.f32 0.0, %v991
        %v993 = vpop.f32.mrb[0].mxu0
        %994 = vmatprep.mubr.bf16.mxu0 0
        %995 = vmatmul.mubr.bf16.gmra.mrb[0].mxu0 %v841
        %v996 = vpop.f32.mrb[0].mxu0
        %v997 = vadd.f32 0.0, %v996
        %v998 = vpop.f32.mrb[0].mxu0
        %v999 = vpop.f32.mrb[0].mxu0
        %v1000 = vadd.f32 0.0, %v999
        %v1001 = vpop.f32.mrb[0].mxu0
        %1002 = vdwg.mxu0
        %v1003 = vstv %s600
        %v1004 = vmul.f32 %v1003, %v941
        %v1005 = vmul.f32 %v1003, %v944
        %v1006 = vmul.f32 %v1003, %v949
        %v1007 = vmul.f32 %v1003, %v952
        %v1008 = vmul.f32 %v1003, %v957
        %v1009 = vmul.f32 %v1003, %v960
        %v1010 = vmul.f32 %v1003, %v965
        %v1011 = vmul.f32 %v1003, %v968
        %v1012 = vmul.f32 %v1003, %v973
        %v1013 = vmul.f32 %v1003, %v976
        %v1014 = vmul.f32 %v1003, %v981
        %v1015 = vmul.f32 %v1003, %v984
        %v1016 = vmul.f32 %v1003, %v989
        %v1017 = vmul.f32 %v1003, %v992
        %v1018 = vmul.f32 %v1003, %v997
        %v1019 = vmul.f32 %v1003, %v1000
        %s1020 = ssub.f32 1.0, %s600
        %v1021 = vstv %s1020
        %v1022 = vmul.f32 %v1021, %v818
        %v1023 = vmul.f32 %v1021, %v819
        %v1024 = vmul.f32 %v1021, %v820
        %v1025 = vmul.f32 %v1021, %v821
        %v1026 = vmul.f32 %v1021, %v822
        %v1027 = vmul.f32 %v1021, %v823
        %v1028 = vmul.f32 %v1021, %v824
        %v1029 = vmul.f32 %v1021, %v825
        %v1030 = vmul.f32 %v1021, %v826
        %v1031 = vmul.f32 %v1021, %v827
        %v1032 = vmul.f32 %v1021, %v828
        %v1033 = vmul.f32 %v1021, %v829
        %v1034 = vmul.f32 %v1021, %v830
        %v1035 = vmul.f32 %v1021, %v831
        %v1036 = vmul.f32 %v1021, %v832
        %v1037 = vmul.f32 %v1021, %v833
        %v1038 = vadd.f32 %v1004, %v1022
        %v1039 = vadd.f32 %v1005, %v1023
        %v1040 = vadd.f32 %v1006, %v1024
        %v1041 = vadd.f32 %v1007, %v1025
        %v1042 = vadd.f32 %v1008, %v1026
        %v1043 = vadd.f32 %v1009, %v1027
        %v1044 = vadd.f32 %v1010, %v1028
        %v1045 = vadd.f32 %v1011, %v1029
        %v1046 = vadd.f32 %v1012, %v1030
        %v1047 = vadd.f32 %v1013, %v1031
        %v1048 = vadd.f32 %v1014, %v1032
        %v1049 = vadd.f32 %v1015, %v1033
        %v1050 = vadd.f32 %v1016, %v1034
        %v1051 = vadd.f32 %v1017, %v1035
        %v1052 = vadd.f32 %v1018, %v1036
        %v1053 = vadd.f32 %v1019, %v1037
        %v1054 = vmax.f32 %v1038, 0.0
        %v1055 = vmax.f32 %v1039, 0.0
        %v1056 = vmax.f32 %v1040, 0.0
        %v1057 = vmax.f32 %v1041, 0.0
        %v1058 = vmax.f32 %v1042, 0.0
        %v1059 = vmax.f32 %v1043, 0.0
        %v1060 = vmax.f32 %v1044, 0.0
        %v1061 = vmax.f32 %v1045, 0.0
        %v1062 = vmax.f32 %v1046, 0.0
        %v1063 = vmax.f32 %v1047, 0.0
        %v1064 = vmax.f32 %v1048, 0.0
        %v1065 = vmax.f32 %v1049, 0.0
        %v1066 = vmax.f32 %v1050, 0.0
        %v1067 = vmax.f32 %v1051, 0.0
        %v1068 = vmax.f32 %v1052, 0.0
        %v1069 = vmax.f32 %v1053, 0.0
        %v1070 = vpack.c.bf16 %v1055, %v1054
        %v1071 = vpack.c.bf16 %v1057, %v1056
        %v1072 = vpack.c.bf16 %v1059, %v1058
        %v1073 = vpack.c.bf16 %v1061, %v1060
        %v1074 = vpack.c.bf16 %v1063, %v1062
        %v1075 = vpack.c.bf16 %v1065, %v1064
        %v1076 = vpack.c.bf16 %v1067, %v1066
        %v1077 = vpack.c.bf16 %v1069, %v1068
        %1078 = vst [vmem:[#allocation2] sm:$0xff] %v1070
        %1079 = vst [vmem:[#allocation2 + $0x8] sm:$0xff] %v1071
        %1080 = vst [vmem:[#allocation2 + $0x10] sm:$0xff] %v1072
        %1081 = vst [vmem:[#allocation2 + $0x18] sm:$0xff] %v1073
        %1082 = vst [vmem:[#allocation2 + $0x20] sm:$0xff] %v1074
        %1083 = vst [vmem:[#allocation2 + $0x28] sm:$0xff] %v1075
        %1084 = vst [vmem:[#allocation2 + $0x30] sm:$0xff] %v1076
        %1085 = vst [vmem:[#allocation2 + $0x38] sm:$0xff] %v1077
        %p1086 = scmp.eq.s32.totalorder %s27, 1
        // Predicated region
        $region65: #{_lambda_.1} parent=47 // pred_check
          %p1087 = pneg %p1086
        $region66: #{_lambda_.1} parent=47 // pred_check_branch
          %1089 = sbr.rel (%p1087) target = $region68
        $region67: #{_lambda_.1} parent=47 // pred_region
          %v1090 = vld [vmem:[#allocation10] sm:$0xf]
          %v1091 = vld [vmem:[#allocation10 + $0x4] sm:$0xf]
          %v1092 = vld [vmem:[#allocation10 + $0x8] sm:$0xf]
          %v1093 = vld [vmem:[#allocation10 + $0xc] sm:$0xf]
          %v1094 = vld [vmem:[#allocation10 + $0x10] sm:$0xf]
          %v1095 = vld [vmem:[#allocation10 + $0x14] sm:$0xf]
          %v1096 = vld [vmem:[#allocation10 + $0x18] sm:$0xf]
          %v1097 = vld [vmem:[#allocation10 + $0x1c] sm:$0xf]
          %v1098 = vld [vmem:[#allocation10 + $0x20] sm:$0xf]
          %v1099 = vld [vmem:[#allocation10 + $0x24] sm:$0xf]
          %v1100 = vld [vmem:[#allocation10 + $0x28] sm:$0xf]
          %v1101 = vld [vmem:[#allocation10 + $0x2c] sm:$0xf]
          %v1102 = vld [vmem:[#allocation10 + $0x30] sm:$0xf]
          %v1103 = vld [vmem:[#allocation10 + $0x34] sm:$0xf]
          %v1104 = vld [vmem:[#allocation10 + $0x38] sm:$0xf]
          %v1105 = vld [vmem:[#allocation10 + $0x3c] sm:$0xf]
          %v1106 = vld [vmem:[%s7] sm:$0x1]
          %v1108 = vlaneseq
          %v1109 = vshrl.u32 %v1108, 7
          %v1110 = vsub.s32 0, %v1109
          %v1111 = vrot.slane %v1106, %v1110
          %v1129 = vunpack.c.l.b16 %v1090
          %v1130 = vunpack.c.l.b16 %v1091
          %v1131 = vunpack.c.l.b16 %v1092
          %v1132 = vunpack.c.l.b16 %v1093
          %v1133 = vunpack.c.l.b16 %v1094
          %v1134 = vunpack.c.l.b16 %v1095
          %v1135 = vunpack.c.l.b16 %v1096
          %v1136 = vunpack.c.l.b16 %v1097
          %v1137 = vunpack.c.l.b16 %v1098
          %v1138 = vunpack.c.l.b16 %v1099
          %v1139 = vunpack.c.l.b16 %v1100
          %v1140 = vunpack.c.l.b16 %v1101
          %v1141 = vunpack.c.l.b16 %v1102
          %v1142 = vunpack.c.l.b16 %v1103
          %v1143 = vunpack.c.l.b16 %v1104
          %v1144 = vunpack.c.l.b16 %v1105
          %v1145 = vpack.c.b16 %v1130, %v1129
          %v1146 = vpack.c.b16 %v1132, %v1131
          %v1147 = vpack.c.b16 %v1134, %v1133
          %v1148 = vpack.c.b16 %v1136, %v1135
          %v1149 = vpack.c.b16 %v1138, %v1137
          %v1150 = vpack.c.b16 %v1140, %v1139
          %v1151 = vpack.c.b16 %v1142, %v1141
          %v1152 = vpack.c.b16 %v1144, %v1143
          %1161 = vmatprep.subr.bf16.mxu0 0
          %1162 = vmatpush1.bf16.msra.mxu0 %v1145
          %1163 = vmatprep.subr.bf16.mxu0 0
          %1164 = vmatpush1.bf16.msra.mxu0 %v1146
          %1165 = vmatprep.subr.bf16.mxu0 0
          %1166 = vmatpush1.bf16.msra.mxu0 %v1147
          %1167 = vmatprep.subr.bf16.mxu0 0
          %1168 = vmatpush1.bf16.msra.mxu0 %v1148
          %1169 = vmatprep.subr.bf16.mxu0 0
          %1170 = vmatpush1.bf16.msra.mxu0 %v1149
          %1171 = vmatprep.subr.bf16.mxu0 0
          %1172 = vmatpush1.bf16.msra.mxu0 %v1150
          %1173 = vmatprep.subr.bf16.mxu0 0
          %1174 = vmatpush1.bf16.msra.mxu0 %v1151
          %1175 = vmatprep.subr.bf16.mxu0 0
          %1176 = vmatpush1.bf16.msra.mxu0 %v1152
          %1177 = vmatprep.subr.bf16.mxu0 0
          %1178 = vmatpush1.bf16.msra.mxu0 0
          %1179 = vmatprep.subr.bf16.mxu0 0
          %1180 = vmatpush1.bf16.msra.mxu0 0
          %1181 = vmatprep.subr.bf16.mxu0 0
          %1182 = vmatpush1.bf16.msra.mxu0 0
          %1183 = vmatprep.subr.bf16.mxu0 0
          %1184 = vmatpush1.bf16.msra.mxu0 0
          %1185 = vmatprep.subr.bf16.mxu0 0
          %1186 = vmatpush1.bf16.msra.mxu0 0
          %1187 = vmatprep.subr.bf16.mxu0 0
          %1188 = vmatpush1.bf16.msra.mxu0 0
          %1189 = vmatprep.subr.bf16.mxu0 0
          %1190 = vmatpush1.bf16.msra.mxu0 0
          %1191 = vmatprep.subr.bf16.mxu0 0
          %1192 = vmatpush1.bf16.msra.mxu0 0
          %1193 = vmatprep.mubr.bf16.mxu0 0
          %1194 = vmatmul.mubr.bf16.gmra.mrb[0].mxu0 %v1070
          %v1195 = vpop.f32.mrb[0].mxu0
          %v1196 = vadd.f32 %v1111, %v1195
          %v1197 = vpop.f32.mrb[0].mxu0
          %v1198 = vpop.f32.mrb[0].mxu0
          %v1199 = vadd.f32 %v1111, %v1198
          %v1200 = vpop.f32.mrb[0].mxu0
          %1201 = vmatprep.mubr.bf16.mxu0 0
          %1202 = vmatmul.mubr.bf16.gmra.mrb[0].mxu0 %v1071
          %v1203 = vpop.f32.mrb[0].mxu0
          %v1204 = vadd.f32 %v1111, %v1203
          %v1205 = vpop.f32.mrb[0].mxu0
          %v1206 = vpop.f32.mrb[0].mxu0
          %v1207 = vadd.f32 %v1111, %v1206
          %v1208 = vpop.f32.mrb[0].mxu0
          %1209 = vmatprep.mubr.bf16.mxu0 0
          %1210 = vmatmul.mubr.bf16.gmra.mrb[0].mxu0 %v1072
          %v1211 = vpop.f32.mrb[0].mxu0
          %v1212 = vadd.f32 %v1111, %v1211
          %v1213 = vpop.f32.mrb[0].mxu0
          %v1214 = vpop.f32.mrb[0].mxu0
          %v1215 = vadd.f32 %v1111, %v1214
          %v1216 = vpop.f32.mrb[0].mxu0
          %1217 = vmatprep.mubr.bf16.mxu0 0
          %1218 = vmatmul.mubr.bf16.gmra.mrb[0].mxu0 %v1073
          %v1219 = vpop.f32.mrb[0].mxu0
          %v1220 = vadd.f32 %v1111, %v1219
          %v1221 = vpop.f32.mrb[0].mxu0
          %v1222 = vpop.f32.mrb[0].mxu0
          %v1223 = vadd.f32 %v1111, %v1222
          %v1224 = vpop.f32.mrb[0].mxu0
          %1225 = vmatprep.mubr.bf16.mxu0 0
          %1226 = vmatmul.mubr.bf16.gmra.mrb[0].mxu0 %v1074
          %v1227 = vpop.f32.mrb[0].mxu0
          %v1228 = vadd.f32 %v1111, %v1227
          %v1229 = vpop.f32.mrb[0].mxu0
          %v1230 = vpop.f32.mrb[0].mxu0
          %v1231 = vadd.f32 %v1111, %v1230
          %v1232 = vpop.f32.mrb[0].mxu0
          %1233 = vmatprep.mubr.bf16.mxu0 0
          %1234 = vmatmul.mubr.bf16.gmra.mrb[0].mxu0 %v1075
          %v1235 = vpop.f32.mrb[0].mxu0
          %v1236 = vadd.f32 %v1111, %v1235
          %v1237 = vpop.f32.mrb[0].mxu0
          %v1238 = vpop.f32.mrb[0].mxu0
          %v1239 = vadd.f32 %v1111, %v1238
          %v1240 = vpop.f32.mrb[0].mxu0
          %1241 = vmatprep.mubr.bf16.mxu0 0
          %1242 = vmatmul.mubr.bf16.gmra.mrb[0].mxu0 %v1076
          %v1243 = vpop.f32.mrb[0].mxu0
          %v1244 = vadd.f32 %v1111, %v1243
          %v1245 = vpop.f32.mrb[0].mxu0
          %v1246 = vpop.f32.mrb[0].mxu0
          %v1247 = vadd.f32 %v1111, %v1246
          %v1248 = vpop.f32.mrb[0].mxu0
          %1249 = vmatprep.mubr.bf16.mxu0 0
          %1250 = vmatmul.mubr.bf16.gmra.mrb[0].mxu0 %v1077
          %v1251 = vpop.f32.mrb[0].mxu0
          %v1252 = vadd.f32 %v1111, %v1251
          %v1253 = vpop.f32.mrb[0].mxu0
          %v1254 = vpop.f32.mrb[0].mxu0
          %v1255 = vadd.f32 %v1111, %v1254
          %v1256 = vpop.f32.mrb[0].mxu0
          %1257 = vdwg.mxu0
          %1258 = vst [vmem:[%s8] sm:$0xff] %v1196
          %1259 = vst [vmem:[%s8 + $0x8] sm:$0xff] %v1199
          %1260 = vst [vmem:[%s8 + $0x10] sm:$0xff] %v1204
          %1261 = vst [vmem:[%s8 + $0x18] sm:$0xff] %v1207
          %1262 = vst [vmem:[%s8 + $0x20] sm:$0xff] %v1212
          %1263 = vst [vmem:[%s8 + $0x28] sm:$0xff] %v1215
          %1264 = vst [vmem:[%s8 + $0x30] sm:$0xff] %v1220
          %1265 = vst [vmem:[%s8 + $0x38] sm:$0xff] %v1223
          %1266 = vst [vmem:[%s8 + $0x40] sm:$0xff] %v1228
          %1267 = vst [vmem:[%s8 + $0x48] sm:$0xff] %v1231
          %1268 = vst [vmem:[%s8 + $0x50] sm:$0xff] %v1236
          %1269 = vst [vmem:[%s8 + $0x58] sm:$0xff] %v1239
          %1270 = vst [vmem:[%s8 + $0x60] sm:$0xff] %v1244
          %1271 = vst [vmem:[%s8 + $0x68] sm:$0xff] %v1247
          %1272 = vst [vmem:[%s8 + $0x70] sm:$0xff] %v1252
          %1273 = vst [vmem:[%s8 + $0x78] sm:$0xff] %v1255
        $region68: #{_lambda_.1} parent=47 // pred_fallthru
          _
        // Predicated region
        $region69: #{_lambda_.1} parent=47 // pred_check
          %p1274 = pneg %p192
        $region70: #{_lambda_.1} parent=47 // pred_check_branch
          %1276 = sbr.rel (%p1274) target = $region72
        $region71: #{_lambda_.1} parent=47 // pred_region
          _
        $region72: #{_lambda_.1} parent=47 // pred_fallthru
          _
        // Predicated region
        $region73: #{_lambda_.1} parent=47 // pred_check
          %p1277 = pneg %p192
        $region74: #{_lambda_.1} parent=47 // pred_check_branch
          %1279 = sbr.rel (%p1277) target = $region76
        $region75: #{_lambda_.1} parent=47 // pred_region
          _
        $region76: #{_lambda_.1} parent=47 // pred_fallthru
          _
      $region48: #{_lambda_.1} parent=5 // pred_fallthru
        _
      %p1280 = scmp.le.s32.totalorder 2, %s22
      // Predicated region
      $region77: #{_lambda_.1} parent=5 // pred_check
        %p1281 = pneg %p1280
      $region78: #{_lambda_.1} parent=5 // pred_check_branch
        %1283 = sbr.rel (%p1281) target = $region80
      $region79: #{_lambda_.1} parent=5 // pred_region
        %s1284 = ssub.s32 %s22, 2
      $region80: #{_lambda_.1} parent=5 // pred_fallthru
        _
    $region6: #{_lambda_.1} parent=1 // loop_footer
      %s26 = sadd.s32 1, %s22
    $region7: #{_lambda_.1} parent=1 // loop_footer_branch
      %21 = sbr.rel target = $region3
    $region8: #{_lambda_.1} parent=1 // loop_exit
      _
    %1285 = vsyncpa [#allocation7], 1
    %s1286 = scalar_lea.sflag [#allocation7], 1
    %1287 = vsyncpa %s1286, 1
    %1288 = vsyncpa [#allocation9], 1

</llo_original>
